<compile_context>
chip_gen: v7x
topology: tpu7x:2x2x1
jax: 0.10.0
libtpu: 0.0.40
codegen_flags: <defaults>
</compile_context>

<pallas_src>
import jax
import jax.numpy as jnp
from jax.experimental import pallas as pl
from jax.experimental.pallas import tpu as pltpu


# ----------------------------------------------------------------------------
# small helpers
# ----------------------------------------------------------------------------
def _round_up(x: int, m: int) -> int:
    return ((x + m - 1) // m) * m


def _cdiv(a: int, b: int) -> int:
    return (a + b - 1) // b


def _pad_to(a, shape):
    """Zero-pad `a` up to `shape`; returns `a` unchanged if already that shape."""
    pads = [(0, t - s) for s, t in zip(a.shape, shape)]
    if all(p == (0, 0) for p in pads):
        return a
    return jnp.pad(a, pads)


def _vmem_capacity_bytes() -> int:
    try:
        return int(pltpu.get_tpu_info().vmem_capacity_bytes)
    except Exception:
        return 64 * 1024 * 1024  # conservative fallback (v7x-sized VMEM)


def pad_ffn_params(w1, b1, w2, b2):
    """Optionally pre-pad parameters once (outside the forward) to 128-aligned
    shapes.  feed_forward() skips all per-call padding when given these."""
    d_model, dff = w1.shape
    d_p = _round_up(d_model, 128)
    f_p = _round_up(dff, 128)
    return (_pad_to(w1, (d_p, f_p)), _pad_to(b1, (f_p,)),
            _pad_to(w2, (f_p, d_p)), _pad_to(b2, (d_p,)))


# ----------------------------------------------------------------------------
# kernels
# ----------------------------------------------------------------------------
def ffn_kernel_fused(x_ref, w1_ref, b1_ref, w2_ref, b2_ref, o_ref):
    """f32 output: accumulate directly into the resident output block
    (saves the tm*d_p*4-byte scratch accumulator)."""
    k = pl.program_id(1)

    @pl.when(k == 0)
    def _init():
        # Seed the accumulator with the output bias -> no finalize pass needed.
        o_ref[...] = jnp.broadcast_to(
            b2_ref[...].astype(o_ref.dtype), o_ref.shape)

    # linear_1 slab: (tm, d_model) @ (d_model, tk) -> f32 (tm, tk)
    h = jnp.dot(x_ref[...], w1_ref[...], preferred_element_type=jnp.float32)
    # bias + ReLU on the f32 MXU result (dropout = identity in eval mode)
    h = jnp.maximum(h + b1_ref[...].astype(jnp.float32), 0.0)
    # linear_2 partial product, accumulated in f32 into the output block.
    o_ref[...] += jnp.dot(h.astype(w2_ref.dtype), w2_ref[...],
                          preferred_element_type=jnp.float32)


def ffn_kernel_scratch(x_ref, w1_ref, b1_ref, w2_ref, b2_ref, o_ref, acc_ref):
    """Narrow output dtypes: f32 scratch accumulator, single downcast at the end."""
    k = pl.program_id(1)

    @pl.when(k == 0)
    def _init():
        acc_ref[...] = jnp.zeros_like(acc_ref)

    h = jnp.dot(x_ref[...], w1_ref[...], preferred_element_type=jnp.float32)
    h = jnp.maximum(h + b1_ref[...].astype(jnp.float32), 0.0)
    acc_ref[...] += jnp.dot(h.astype(w2_ref.dtype), w2_ref[...],
                            preferred_element_type=jnp.float32)

    @pl.when(k == pl.num_programs(1) - 1)
    def _finalize():
        o_ref[...] = (acc_ref[...] + b2_ref[...].astype(jnp.float32)
                      ).astype(o_ref.dtype)


# ----------------------------------------------------------------------------
# wrapper
# ----------------------------------------------------------------------------
def feed_forward(x, w1, b1, w2, b2, *, matmul_dtype=None, tm=None, tk=None):
    """x: (batch, seq, d_model) -> (batch, seq, d_model).

    Weights are stored (in, out); the kernel computes x @ W1, ReLU, @ W2.
    matmul_dtype (e.g. jnp.bfloat16) optionally down-casts the MXU operands
    while keeping f32 accumulation and the original output dtype.
    """
    batch, seq, d_model = x.shape
    dff = w1.shape[1]
    out_dtype = x.dtype
    M = batch * seq

    if matmul_dtype is not None:
        x = x.astype(matmul_dtype)
        w1 = w1.astype(matmul_dtype)
        w2 = w2.astype(matmul_dtype)

    d_p = _round_up(d_model, 128)
    f_p = _round_up(dff, 128)          # pad dff only to 128 (not to tk)
    m8 = _round_up(M, 8)

    isz_x = jnp.dtype(x.dtype).itemsize
    isz_w = jnp.dtype(w1.dtype).itemsize
    isz_o = jnp.dtype(out_dtype).itemsize
    use_scratch = out_dtype != jnp.float32

    vmem_cap = _vmem_capacity_bytes()
    big_vmem = vmem_cap >= 100 * 1024 * 1024   # v5e / v6e (128 MiB) vs v7x (64 MiB)
    budget = int(0.85 * vmem_cap)              # leave headroom for compiler scratch

    # ---- tk: largest multiple of 128 that divides f_p and fits the slab budget
    if tk is None:
        tk_max = 1024 if big_vmem else 512
        if isz_w >= 4:                 # f32 weights: halve the slab budget
            tk_max //= 2
        tk = 128
        for cand in range(min(tk_max, f_p), 127, -128):
            if f_p % cand == 0 and 4 * cand * d_p * isz_w <= budget // 2:
                tk = cand
                break

    # ---- tm: as large as the roofline wants and the VMEM budget allows -----
    if tm is None:
        tm_target = 1024 if big_vmem else 512
        fixed = 4 * tk * d_p * isz_w + 2 * (tk + d_p) * 4        # weight slabs + biases
        per_row = (2 * d_p * isz_x + 2 * d_p * isz_o
                   + (d_p * 4 if use_scratch else 0))            # x + out (+ acc) per M row
        tm_fit = max(8, ((budget - fixed) // max(per_row, 1)) // 8 * 8)
        tm_cap = max(8, min(tm_target, tm_fit))
        n_m = max(1, _cdiv(m8, tm_cap))
        # 64-MiB parts have 2 TensorCores: keep >= 2 M-tiles for large M so the
        # "parallel" axis actually feeds both cores.
        if (not big_vmem) and n_m < 2 and m8 >= 2 * 384:
            n_m = 2
        tm = _round_up(_cdiv(m8, n_m), 8)       # last M-tile nearly full
    n_m = _cdiv(m8, tm)
    m_p = n_m * tm

    # ---- pad (skipped when already aligned / pre-padded) --------------------
    x_p = _pad_to(x.reshape(M, d_model), (m_p, d_p))
    w1_p = _pad_to(w1, (d_p, f_p))
    b1_p = _pad_to(b1.reshape(1, -1), (1, f_p))
    w2_p = _pad_to(w2, (f_p, d_p))
    b2_p = _pad_to(b2.reshape(1, -1), (1, d_p))

    # ---- VMEM limit derived from the actual tile footprint ------------------
    est = (2 * tm * d_p * isz_x                 # x tiles (double-buffered)
           + 4 * tk * d_p * isz_w               # w1 + w2 slabs (double-buffered)
           + 2 * (tk + d_p) * 4                 # bias slabs
           + 2 * tm * d_p * isz_o               # output tiles
           + (tm * d_p * 4 if use_scratch else 0))
    vmem_limit = int(max(min(int(est * 1.25), int(0.9 * vmem_cap)),
                         32 * 1024 * 1024))

    grid = (m_p // tm, f_p // tk)
    kernel = ffn_kernel_scratch if use_scratch else ffn_kernel_fused
    scratch = [pltpu.VMEM((tm, d_p), jnp.float32)] if use_scratch else []

    out = pl.pallas_call(
        kernel,
        out_shape=jax.ShapeDtypeStruct((m_p, d_p), out_dtype),
        grid_spec=pltpu.PrefetchScalarGridSpec(
            num_scalar_prefetch=0,
            grid=grid,
            in_specs=[
                pl.BlockSpec((tm, d_p), lambda i, k: (i, 0)),   # x tile (resident over k)
                pl.BlockSpec((d_p, tk), lambda i, k: (0, k)),   # w1 slab
                pl.BlockSpec((1, tk), lambda i, k: (0, k)),     # b1 slab
                pl.BlockSpec((tk, d_p), lambda i, k: (k, 0)),   # w2 slab
                pl.BlockSpec((1, d_p), lambda i, k: (0, 0)),    # b2 (resident)
            ],
            out_specs=pl.BlockSpec((tm, d_p), lambda i, k: (i, 0)),
            scratch_shapes=scratch,
        ),
        compiler_params=pltpu.CompilerParams(
            dimension_semantics=("parallel", "arbitrary"),
            vmem_limit_bytes=vmem_limit),
    )(x_p, w1_p, b1_p, w2_p, b2_p)

    return out[:M, :d_model].reshape(batch, seq, d_model)


# ----------------------------------------------------------------------------
# params + demo
# ----------------------------------------------------------------------------
def init_params(key, d_model, dff, dtype=jnp.float32):
    # Deterministic init (PyTorch-style uniform bounds); weights stored (in, out).
    k1, k2, k3, k4 = jax.random.split(key, 4)
    bound1 = 1.0 / (d_model ** 0.5)
    bound2 = 1.0 / (dff ** 0.5)
    w1 = jax.random.uniform(k1, (d_model, dff), dtype, -bound1, bound1)
    b1 = jax.random.uniform(k2, (dff,), dtype, -bound1, bound1)
    w2 = jax.random.uniform(k3, (dff, d_model), dtype, -bound2, bound2)
    b2 = jax.random.uniform(k4, (d_model,), dtype, -bound2, bound2)
    return w1, b1, w2, b2


if __name__ == "__main__":
    batch, seq, d_model, dff = 2, 8, 32, 64
    key = jax.random.PRNGKey(0)
    kx, kp = jax.random.split(key)

    x = jax.random.normal(kx, (batch, seq, d_model), dtype=jnp.float32)
    w1, b1, w2, b2 = init_params(kp, d_model, dff)

    # plain-JAX reference
    ref = jnp.maximum(x.reshape(-1, d_model) @ w1 + b1, 0.0) @ w2 + b2
    ref = ref.reshape(batch, seq, d_model)

    # 1) direct call (padding done in-wrapper)
    y = feed_forward(x, w1, b1, w2, b2)
    y = jax.block_until_ready(y)
    assert jnp.allclose(y, ref, atol=1e-5, rtol=1e-5), "mismatch vs reference"

    # 2) pre-padded params (per-call padding skipped entirely)
    w1p, b1p, w2p, b2p = pad_ffn_params(w1, b1, w2, b2)
    y2 = jax.block_until_ready(feed_forward(x, w1p, b1p, w2p, b2p))
    assert jnp.allclose(y2, ref, atol=1e-5, rtol=1e-5), "mismatch (pre-padded)"

    print("KERNEL_OK")
</pallas_src>

<mosaic_0001>
module attributes {stable_mosaic.version = 11 : i64} {
  func.func @ffn_kernel_fused(%arg0: i32, %arg1: i32, %arg2: memref<16x128xf32, #tpu.memory_space<vmem>>, %arg3: memref<128x128xf32, #tpu.memory_space<vmem>>, %arg4: memref<1x128xf32, #tpu.memory_space<vmem>>, %arg5: memref<128x128xf32, #tpu.memory_space<vmem>>, %arg6: memref<1x128xf32, #tpu.memory_space<vmem>>, %arg7: memref<16x128xf32, #tpu.memory_space<vmem>>) attributes {dimension_semantics = [#tpu.dimension_semantics<parallel>, #tpu.dimension_semantics<arbitrary>], iteration_bounds = array<i64: 1, 1>, scalar_prefetch = 0 : i64, scratch_operands = 0 : i64, tpu.core_type = #tpu.core_type<tc>, window_params = [{transform_indices = @transform_0, window_bounds = array<i64: 16, 128>}, {transform_indices = @transform_1, window_bounds = array<i64: 128, 128>}, {transform_indices = @transform_2, window_bounds = array<i64: 1, 128>}, {transform_indices = @transform_3, window_bounds = array<i64: 128, 128>}, {pipeline_mode = #tpu.pipeline_mode<synchronous>, transform_indices = @transform_4, window_bounds = array<i64: 1, 128>}, {transform_indices = @transform_5, window_bounds = array<i64: 16, 128>}]} {
    %c0_i32 = arith.constant 0 : i32
    %0 = arith.cmpi eq, %arg1, %c0_i32 : i32
    %1 = arith.extui %0 : i1 to i32
    %c0_i32_0 = arith.constant 0 : i32
    %2 = arith.cmpi ne, %1, %c0_i32_0 : i32
    scf.if %2 {
      %c0_14 = arith.constant 0 : index
      %c0_15 = arith.constant 0 : index
      %16 = vector.load %arg6[%c0_14, %c0_15] : memref<1x128xf32, #tpu.memory_space<vmem>>, vector<1x128xf32>
      %17 = vector.shape_cast %16 : vector<1x128xf32> to vector<1x128xf32>
      %18 = vector.broadcast %17 : vector<1x128xf32> to vector<16x128xf32>
      %c0_16 = arith.constant 0 : index
      %c0_17 = arith.constant 0 : index
      %19 = vector.load %arg7[%c0_16, %c0_17] : memref<16x128xf32, #tpu.memory_space<vmem>>, vector<16x128xf32>
      tpu.vector_store %arg7[%c0_16, %c0_17], %18 {strides = array<i32>} : memref<16x128xf32, #tpu.memory_space<vmem>>, vector<16x128xf32>,
    } else {
    }
    %c0 = arith.constant 0 : index
    %c0_1 = arith.constant 0 : index
    %3 = vector.load %arg2[%c0, %c0_1] : memref<16x128xf32, #tpu.memory_space<vmem>>, vector<16x128xf32>
    %c0_2 = arith.constant 0 : index
    %c0_3 = arith.constant 0 : index
    %4 = vector.load %arg3[%c0_2, %c0_3] : memref<128x128xf32, #tpu.memory_space<vmem>>, vector<128x128xf32>
    %cst = arith.constant dense<0.000000e+00> : vector<16x128xf32>
    %5 = tpu.matmul %3, %4, %cst {dimension_numbers = #tpu.dot_dimension_numbers<[1], [0], [0], [1], [0, 0, 1, 1], [], []>} : vector<16x128xf32>, vector<128x128xf32>, vector<16x128xf32> -> vector<16x128xf32>
    %c0_4 = arith.constant 0 : index
    %c0_5 = arith.constant 0 : index
    %6 = vector.load %arg4[%c0_4, %c0_5] : memref<1x128xf32, #tpu.memory_space<vmem>>, vector<1x128xf32>
    %7 = vector.broadcast %6 : vector<1x128xf32> to vector<16x128xf32>
    %8 = arith.addf %5, %7 : vector<16x128xf32>
    %cst_6 = arith.constant 0.000000e+00 : f32
    %9 = vector.broadcast %cst_6 : f32 to vector<16x128xf32>
    %10 = arith.maximumf %8, %9 : vector<16x128xf32>
    %c0_7 = arith.constant 0 : index
    %c0_8 = arith.constant 0 : index
    %11 = vector.load %arg7[%c0_7, %c0_8] : memref<16x128xf32, #tpu.memory_space<vmem>>, vector<16x128xf32>
    %c0_9 = arith.constant 0 : index
    %c0_10 = arith.constant 0 : index
    %12 = vector.load %arg5[%c0_9, %c0_10] : memref<128x128xf32, #tpu.memory_space<vmem>>, vector<128x128xf32>
    %cst_11 = arith.constant dense<0.000000e+00> : vector<16x128xf32>
    %13 = tpu.matmul %10, %12, %cst_11 {dimension_numbers = #tpu.dot_dimension_numbers<[1], [0], [0], [1], [0, 0, 1, 1], [], []>} : vector<16x128xf32>, vector<128x128xf32>, vector<16x128xf32> -> vector<16x128xf32>
    %14 = arith.addf %11, %13 : vector<16x128xf32>
    %c0_12 = arith.constant 0 : index
    %c0_13 = arith.constant 0 : index
    %15 = vector.load %arg7[%c0_12, %c0_13] : memref<16x128xf32, #tpu.memory_space<vmem>>, vector<16x128xf32>
    tpu.vector_store %arg7[%c0_12, %c0_13], %14 {strides = array<i32>} : memref<16x128xf32, #tpu.memory_space<vmem>>, vector<16x128xf32>,
    return
  }
  func.func @transform_0(%arg0: i32, %arg1: i32) -> (i32, i32) {
    %c0_i32 = arith.constant 0 : i32
    %c0_i32_0 = arith.constant 0 : i32
    return %arg0, %c0_i32 : i32, i32
  }
  func.func @transform_1(%arg0: i32, %arg1: i32) -> (i32, i32) {
    %c0_i32 = arith.constant 0 : i32
    %c0_i32_0 = arith.constant 0 : i32
    return %c0_i32, %arg1 : i32, i32
  }
  func.func @transform_2(%arg0: i32, %arg1: i32) -> (i32, i32) {
    %c0_i32 = arith.constant 0 : i32
    %c0_i32_0 = arith.constant 0 : i32
    return %c0_i32, %arg1 : i32, i32
  }
  func.func @transform_3(%arg0: i32, %arg1: i32) -> (i32, i32) {
    %c0_i32 = arith.constant 0 : i32
    %c0_i32_0 = arith.constant 0 : i32
    return %arg1, %c0_i32 : i32, i32
  }
  func.func @transform_4(%arg0: i32, %arg1: i32) -> (i32, i32) {
    %c0_i32 = arith.constant 0 : i32
    %c0_i32_0 = arith.constant 0 : i32
    %c0_i32_1 = arith.constant 0 : i32
    return %c0_i32, %c0_i32_0 : i32, i32
  }
  func.func @transform_5(%arg0: i32, %arg1: i32) -> (i32, i32) {
    %c0_i32 = arith.constant 0 : i32
    %c0_i32_0 = arith.constant 0 : i32
    return %arg0, %c0_i32 : i32, i32
  }
}

</mosaic_0001>

<llo_original>
// kernel: tpu_custom_call.1
$region0: #{tpu_custom_call.1}
  #allocation0 [shape = 'u32[]', space=smem, size = 0x4, offset = 0x4, fixed_abs, tag = 'smem constant byte address 0x4 - core index']
  #allocation1 [shape = 'u32[144,128]{1,0:T(1,128)}', space=vmem, size = 0x12000, scoped, tag = 'internal scratch']
  %s0 = inlined_call_operand.hbm [shape: f32[16,128], index: 0, kind: input, shape index: {}]
  %s1 = inlined_call_operand.hbm [shape: f32[128,128], index: 1, kind: input, shape index: {}]
  %s2 = inlined_call_operand.vmem [shape: f32[1,128], index: 2, kind: input, shape index: {}]
  %s3 = inlined_call_operand.hbm [shape: f32[128,128], index: 3, kind: input, shape index: {}]
  %s4 = inlined_call_operand.vmem [shape: f32[1,128], index: 4, kind: input, shape index: {}]
  %s5 = inlined_call_operand.hbm [shape: f32[16,128], index: 5, kind: output, shape index: {}]
  %s6 = sld [smem:[#allocation0]]
  $region46: #{tpu_custom_call.1} parent=0
    _
  %s8 = ssub.s32 1, %s6
  %s9 = scalar_select 0, %s8, %s6
  $region1: #{tpu_custom_call.1} parent=0
    #allocation2 [shape = 'u8[8192]{0}', space=vmem, size = 0x2000, scoped, tag = 'input window, operand 0, single buffered']
    #allocation3 [shape = 's32[1]{0}', space=sflag, size = 0x4, scoped, tag = 'scoped memory for tpu_custom_call.1']
    #allocation4 [shape = 's32[1]{0}', space=sflag, size = 0x4, scoped, tag = 'scoped memory for tpu_custom_call.1']
    #allocation5 [shape = 'u8[65536]{0}', space=vmem, size = 0x10000, scoped, tag = 'input window, operand 1, single buffered']
    #allocation6 [shape = 's32[1]{0}', space=sflag, size = 0x4, scoped, tag = 'scoped memory for tpu_custom_call.1']
    #allocation7 [shape = 'u8[65536]{0}', space=vmem, size = 0x10000, scoped, tag = 'input window, operand 3, single buffered']
    #allocation8 [shape = 'u8[8192]{0}', space=vmem, size = 0x2000, scoped, tag = 'output window, operand 0, single buffered']
    %10 = vsyncpa [#allocation3], 0
    %11 = vsyncpa [#allocation6], 0
    %12 = vsyncpa [#allocation4], 0
    // Predicated region
    $region2: #{tpu_custom_call.1} parent=1 // pred_check
      _
    $region3: #{tpu_custom_call.1} parent=1 // pred_check_branch
      %14 = sbr.rel (0) target = $region5
    $region4: #{tpu_custom_call.1} parent=1 // pred_region
      %s16 = ssub.s32 256, 256
      %17 = vsyncadd [#allocation3], %s16
      %s18 = sshll.u32 [#allocation2], 4
      %s19 = int_to_ptr.vmem [resolvable:$true] %s18
      %24 = dma.hbm_to_vmem [thread:$0]  %s0, 256, %s19, [#allocation3], 128, 128, 8
    $region5: #{tpu_custom_call.1} parent=1 // pred_fallthru
      _
    // Predicated region
    $region6: #{tpu_custom_call.1} parent=1 // pred_check
      _
    $region7: #{tpu_custom_call.1} parent=1 // pred_check_branch
      %26 = sbr.rel (0) target = $region9
    $region8: #{tpu_custom_call.1} parent=1 // pred_region
      %s28 = ssub.s32 2048, 2048
      %29 = vsyncadd [#allocation6], %s28
      %s30 = sshll.u32 [#allocation5], 4
      %s31 = int_to_ptr.vmem [resolvable:$true] %s30
      %36 = dma.hbm_to_vmem [thread:$0]  %s1, 2048, %s31, [#allocation6], 128, 128, 8
    $region9: #{tpu_custom_call.1} parent=1 // pred_fallthru
      _
    // Predicated region
    $region10: #{tpu_custom_call.1} parent=1 // pred_check
      _
    $region11: #{tpu_custom_call.1} parent=1 // pred_check_branch
      %38 = sbr.rel (0) target = $region13
    $region12: #{tpu_custom_call.1} parent=1 // pred_region
      _
    $region13: #{tpu_custom_call.1} parent=1 // pred_fallthru
      _
    // Predicated region
    $region14: #{tpu_custom_call.1} parent=1 // pred_check
      _
    $region15: #{tpu_custom_call.1} parent=1 // pred_check_branch
      %40 = sbr.rel (0) target = $region17
    $region16: #{tpu_custom_call.1} parent=1 // pred_region
      %s42 = ssub.s32 2048, 2048
      %43 = vsyncadd [#allocation6], %s42
      %s44 = sshll.u32 [#allocation7], 4
      %s45 = int_to_ptr.vmem [resolvable:$true] %s44
      %50 = dma.hbm_to_vmem [thread:$0]  %s3, 2048, %s45, [#allocation6], 128, 128, 8
    $region17: #{tpu_custom_call.1} parent=1 // pred_fallthru
      _
    // Predicated region
    $region18: #{tpu_custom_call.1} parent=1 // pred_check
      _
    $region19: #{tpu_custom_call.1} parent=1 // pred_check_branch
      %52 = sbr.rel (0) target = $region21
    $region20: #{tpu_custom_call.1} parent=1 // pred_region
      _
    $region21: #{tpu_custom_call.1} parent=1 // pred_fallthru
      _
    // Predicated region
    $region22: #{tpu_custom_call.1} parent=1 // pred_check
      _
    $region23: #{tpu_custom_call.1} parent=1 // pred_check_branch
      %54 = sbr.rel (0) target = $region25
    $region24: #{tpu_custom_call.1} parent=1 // pred_region
      %55 = dma.done [#allocation3], 256
    $region25: #{tpu_custom_call.1} parent=1 // pred_fallthru
      _
    // Predicated region
    $region26: #{tpu_custom_call.1} parent=1 // pred_check
      _
    $region27: #{tpu_custom_call.1} parent=1 // pred_check_branch
      %57 = sbr.rel (0) target = $region29
    $region28: #{tpu_custom_call.1} parent=1 // pred_region
      %58 = dma.done [#allocation6], 2048
    $region29: #{tpu_custom_call.1} parent=1 // pred_fallthru
      _
    // Predicated region
    $region30: #{tpu_custom_call.1} parent=1 // pred_check
      _
    $region31: #{tpu_custom_call.1} parent=1 // pred_check_branch
      %60 = sbr.rel (0) target = $region33
    $region32: #{tpu_custom_call.1} parent=1 // pred_region
      %61 = dma.done [#allocation6], 2048
    $region33: #{tpu_custom_call.1} parent=1 // pred_fallthru
      _
    %p62 = scmp.eq.s32.totalorder 0, 0
    // Predicated region
    $region34: #{tpu_custom_call.1} parent=1 // pred_check
      %p63 = pneg %p62
    $region35: #{tpu_custom_call.1} parent=1 // pred_check_branch
      %65 = sbr.rel (%p63) target = $region37
    $region36: #{tpu_custom_call.1} parent=1 // pred_region
      %v66 = vld [vmem:[%s4] sm:$0x1]
      %v68 = vlaneseq
      %v69 = vshrl.u32 %v68, 7
      %v70 = vsub.s32 0, %v69
      %v71 = vrot.slane %v66, %v70
      %73 = vst [vmem:[#allocation8] sm:$0xff] %v71
      %74 = vst [vmem:[#allocation8 + $0x8] sm:$0xff] %v71
    $region37: #{tpu_custom_call.1} parent=1 // pred_fallthru
      _
    %v75 = vld [vmem:[#allocation2] sm:$0xff]
    %v76 = vld [vmem:[#allocation2 + $0x8] sm:$0xff]
    %v77 = vld [vmem:[#allocation5] sm:$0xff]
    %v78 = vld [vmem:[#allocation5 + $0x8] sm:$0xff]
    %v79 = vld [vmem:[#allocation5 + $0x10] sm:$0xff]
    %v80 = vld [vmem:[#allocation5 + $0x18] sm:$0xff]
    %v81 = vld [vmem:[#allocation5 + $0x20] sm:$0xff]
    %v82 = vld [vmem:[#allocation5 + $0x28] sm:$0xff]
    %v83 = vld [vmem:[#allocation5 + $0x30] sm:$0xff]
    %v84 = vld [vmem:[#allocation5 + $0x38] sm:$0xff]
    %v85 = vld [vmem:[#allocation5 + $0x40] sm:$0xff]
    %v86 = vld [vmem:[#allocation5 + $0x48] sm:$0xff]
    %v87 = vld [vmem:[#allocation5 + $0x50] sm:$0xff]
    %v88 = vld [vmem:[#allocation5 + $0x58] sm:$0xff]
    %v89 = vld [vmem:[#allocation5 + $0x60] sm:$0xff]
    %v90 = vld [vmem:[#allocation5 + $0x68] sm:$0xff]
    %v91 = vld [vmem:[#allocation5 + $0x70] sm:$0xff]
    %v92 = vld [vmem:[#allocation5 + $0x78] sm:$0xff]
    %v93 = vld [vmem:[%s2] sm:$0x1]
    %v95 = vlaneseq
    %v96 = vshrl.u32 %v95, 7
    %v97 = vsub.s32 0, %v96
    %v98 = vrot.slane %v93, %v97
    %100 = vmatprep.subr.mxu0 0.0
    %101 = vmatpush1.msra.mxu0 %v77
    %102 = vmatprep.subr.mxu0 0.0
    %103 = vmatpush1.msra.mxu0 %v78
    %104 = vmatprep.subr.mxu0 0.0
    %105 = vmatpush1.msra.mxu0 %v79
    %106 = vmatprep.subr.mxu0 0.0
    %107 = vmatpush1.msra.mxu0 %v80
    %108 = vmatprep.subr.mxu0 0.0
    %109 = vmatpush1.msra.mxu0 %v81
    %110 = vmatprep.subr.mxu0 0.0
    %111 = vmatpush1.msra.mxu0 %v82
    %112 = vmatprep.subr.mxu0 0.0
    %113 = vmatpush1.msra.mxu0 %v83
    %114 = vmatprep.subr.mxu0 0.0
    %115 = vmatpush1.msra.mxu0 %v84
    %116 = vmatprep.subr.mxu0 0.0
    %117 = vmatpush1.msra.mxu0 %v85
    %118 = vmatprep.subr.mxu0 0.0
    %119 = vmatpush1.msra.mxu0 %v86
    %120 = vmatprep.subr.mxu0 0.0
    %121 = vmatpush1.msra.mxu0 %v87
    %122 = vmatprep.subr.mxu0 0.0
    %123 = vmatpush1.msra.mxu0 %v88
    %124 = vmatprep.subr.mxu0 0.0
    %125 = vmatpush1.msra.mxu0 %v89
    %126 = vmatprep.subr.mxu0 0.0
    %127 = vmatpush1.msra.mxu0 %v90
    %128 = vmatprep.subr.mxu0 0.0
    %129 = vmatpush1.msra.mxu0 %v91
    %130 = vmatprep.subr.mxu0 0.0
    %131 = vmatpush1.msra.mxu0 %v92
    %132 = vmatprep.subr.mxu0 0.0
    %133 = vmatpush1.msra.mxu0 0.0
    %134 = vmatprep.subr.mxu0 0.0
    %135 = vmatpush1.msra.mxu0 0.0
    %136 = vmatprep.subr.mxu0 0.0
    %137 = vmatpush1.msra.mxu0 0.0
    %138 = vmatprep.subr.mxu0 0.0
    %139 = vmatpush1.msra.mxu0 0.0
    %140 = vmatprep.subr.mxu0 0.0
    %141 = vmatpush1.msra.mxu0 0.0
    %142 = vmatprep.subr.mxu0 0.0
    %143 = vmatpush1.msra.mxu0 0.0
    %144 = vmatprep.subr.mxu0 0.0
    %145 = vmatpush1.msra.mxu0 0.0
    %146 = vmatprep.subr.mxu0 0.0
    %147 = vmatpush1.msra.mxu0 0.0
    %148 = vmatprep.subr.mxu0 0.0
    %149 = vmatpush1.msra.mxu0 0.0
    %150 = vmatprep.subr.mxu0 0.0
    %151 = vmatpush1.msra.mxu0 0.0
    %152 = vmatprep.subr.mxu0 0.0
    %153 = vmatpush1.msra.mxu0 0.0
    %154 = vmatprep.subr.mxu0 0.0
    %155 = vmatpush1.msra.mxu0 0.0
    %156 = vmatprep.subr.mxu0 0.0
    %157 = vmatpush1.msra.mxu0 0.0
    %158 = vmatprep.subr.mxu0 0.0
    %159 = vmatpush1.msra.mxu0 0.0
    %160 = vmatprep.subr.mxu0 0.0
    %161 = vmatpush1.msra.mxu0 0.0
    %162 = vmatprep.subr.mxu0 0.0
    %163 = vmatpush1.msra.mxu0 0.0
    %164 = vmatprep.mubr.f32.mxu0 0.0
    %165 = vmatmul.mubr.f32.gmra.mrb[0].mxu0 %v75
    %v166 = vpop.f32.mrb[0].mxu0
    %v167 = vadd.f32 %v98, %v166
    %v168 = vpop.f32.mrb[0].mxu0
    %169 = vmatprep.mubr.f32.mxu0 0.0
    %170 = vmatmul.mubr.f32.gmra.mrb[0].mxu0 %v76
    %v171 = vpop.f32.mrb[0].mxu0
    %v172 = vadd.f32 %v98, %v171
    %v173 = vpop.f32.mrb[0].mxu0
    %174 = vdwg.mxu0
    %v175 = vmax.f32 %v167, 0.0
    %v176 = vmax.f32 %v172, 0.0
    %v177 = vld [vmem:[#allocation8] sm:$0xff]
    %v178 = vld [vmem:[#allocation8 + $0x8] sm:$0xff]
    %v179 = vld [vmem:[#allocation7] sm:$0xff]
    %v180 = vld [vmem:[#allocation7 + $0x8] sm:$0xff]
    %v181 = vld [vmem:[#allocation7 + $0x10] sm:$0xff]
    %v182 = vld [vmem:[#allocation7 + $0x18] sm:$0xff]
    %v183 = vld [vmem:[#allocation7 + $0x20] sm:$0xff]
    %v184 = vld [vmem:[#allocation7 + $0x28] sm:$0xff]
    %v185 = vld [vmem:[#allocation7 + $0x30] sm:$0xff]
    %v186 = vld [vmem:[#allocation7 + $0x38] sm:$0xff]
    %v187 = vld [vmem:[#allocation7 + $0x40] sm:$0xff]
    %v188 = vld [vmem:[#allocation7 + $0x48] sm:$0xff]
    %v189 = vld [vmem:[#allocation7 + $0x50] sm:$0xff]
    %v190 = vld [vmem:[#allocation7 + $0x58] sm:$0xff]
    %v191 = vld [vmem:[#allocation7 + $0x60] sm:$0xff]
    %v192 = vld [vmem:[#allocation7 + $0x68] sm:$0xff]
    %v193 = vld [vmem:[#allocation7 + $0x70] sm:$0xff]
    %v194 = vld [vmem:[#allocation7 + $0x78] sm:$0xff]
    %195 = vmatprep.subr.mxu0 0.0
    %196 = vmatpush1.msra.mxu0 %v179
    %197 = vmatprep.subr.mxu0 0.0
    %198 = vmatpush1.msra.mxu0 %v180
    %199 = vmatprep.subr.mxu0 0.0
    %200 = vmatpush1.msra.mxu0 %v181
    %201 = vmatprep.subr.mxu0 0.0
    %202 = vmatpush1.msra.mxu0 %v182
    %203 = vmatprep.subr.mxu0 0.0
    %204 = vmatpush1.msra.mxu0 %v183
    %205 = vmatprep.subr.mxu0 0.0
    %206 = vmatpush1.msra.mxu0 %v184
    %207 = vmatprep.subr.mxu0 0.0
    %208 = vmatpush1.msra.mxu0 %v185
    %209 = vmatprep.subr.mxu0 0.0
    %210 = vmatpush1.msra.mxu0 %v186
    %211 = vmatprep.subr.mxu0 0.0
    %212 = vmatpush1.msra.mxu0 %v187
    %213 = vmatprep.subr.mxu0 0.0
    %214 = vmatpush1.msra.mxu0 %v188
    %215 = vmatprep.subr.mxu0 0.0
    %216 = vmatpush1.msra.mxu0 %v189
    %217 = vmatprep.subr.mxu0 0.0
    %218 = vmatpush1.msra.mxu0 %v190
    %219 = vmatprep.subr.mxu0 0.0
    %220 = vmatpush1.msra.mxu0 %v191
    %221 = vmatprep.subr.mxu0 0.0
    %222 = vmatpush1.msra.mxu0 %v192
    %223 = vmatprep.subr.mxu0 0.0
    %224 = vmatpush1.msra.mxu0 %v193
    %225 = vmatprep.subr.mxu0 0.0
    %226 = vmatpush1.msra.mxu0 %v194
    %227 = vmatprep.subr.mxu0 0.0
    %228 = vmatpush1.msra.mxu0 0.0
    %229 = vmatprep.subr.mxu0 0.0
    %230 = vmatpush1.msra.mxu0 0.0
    %231 = vmatprep.subr.mxu0 0.0
    %232 = vmatpush1.msra.mxu0 0.0
    %233 = vmatprep.subr.mxu0 0.0
    %234 = vmatpush1.msra.mxu0 0.0
    %235 = vmatprep.subr.mxu0 0.0
    %236 = vmatpush1.msra.mxu0 0.0
    %237 = vmatprep.subr.mxu0 0.0
    %238 = vmatpush1.msra.mxu0 0.0
    %239 = vmatprep.subr.mxu0 0.0
    %240 = vmatpush1.msra.mxu0 0.0
    %241 = vmatprep.subr.mxu0 0.0
    %242 = vmatpush1.msra.mxu0 0.0
    %243 = vmatprep.subr.mxu0 0.0
    %244 = vmatpush1.msra.mxu0 0.0
    %245 = vmatprep.subr.mxu0 0.0
    %246 = vmatpush1.msra.mxu0 0.0
    %247 = vmatprep.subr.mxu0 0.0
    %248 = vmatpush1.msra.mxu0 0.0
    %249 = vmatprep.subr.mxu0 0.0
    %250 = vmatpush1.msra.mxu0 0.0
    %251 = vmatprep.subr.mxu0 0.0
    %252 = vmatpush1.msra.mxu0 0.0
    %253 = vmatprep.subr.mxu0 0.0
    %254 = vmatpush1.msra.mxu0 0.0
    %255 = vmatprep.subr.mxu0 0.0
    %256 = vmatpush1.msra.mxu0 0.0
    %257 = vmatprep.subr.mxu0 0.0
    %258 = vmatpush1.msra.mxu0 0.0
    %259 = vmatprep.mubr.f32.mxu0 0.0
    %260 = vmatmul.mubr.f32.gmra.mrb[0].mxu0 %v175
    %v261 = vpop.f32.mrb[0].mxu0
    %v262 = vadd.f32 0.0, %v261
    %v263 = vpop.f32.mrb[0].mxu0
    %264 = vmatprep.mubr.f32.mxu0 0.0
    %265 = vmatmul.mubr.f32.gmra.mrb[0].mxu0 %v176
    %v266 = vpop.f32.mrb[0].mxu0
    %v267 = vadd.f32 0.0, %v266
    %v268 = vpop.f32.mrb[0].mxu0
    %269 = vdwg.mxu0
    %v270 = vadd.f32 %v177, %v262
    %v271 = vadd.f32 %v178, %v267
    %272 = vst [vmem:[#allocation8] sm:$0xff] %v270
    %273 = vst [vmem:[#allocation8 + $0x8] sm:$0xff] %v271
    // Predicated region
    $region38: #{tpu_custom_call.1} parent=1 // pred_check
      _
    $region39: #{tpu_custom_call.1} parent=1 // pred_check_branch
      %275 = sbr.rel (0) target = $region41
    $region40: #{tpu_custom_call.1} parent=1 // pred_region
      %s277 = ssub.s32 256, 256
      %278 = vsyncadd [#allocation4], %s277
      %s279 = sshll.u32 [#allocation8], 4
      %s280 = int_to_ptr.vmem [resolvable:$true] %s279
      %285 = dma.vmem_to_hbm [thread:$0]  %s280, 256, %s5, [#allocation4], 128, 128, 8
    $region41: #{tpu_custom_call.1} parent=1 // pred_fallthru
      _
    // Predicated region
    $region42: #{tpu_custom_call.1} parent=1 // pred_check
      _
    $region43: #{tpu_custom_call.1} parent=1 // pred_check_branch
      %287 = sbr.rel (0) target = $region45
    $region44: #{tpu_custom_call.1} parent=1 // pred_region
      %288 = dma.done [#allocation4], 256
    $region45: #{tpu_custom_call.1} parent=1 // pred_fallthru
      _
    %289 = vsyncpa [#allocation3], 1
    %290 = vsyncpa [#allocation6], 1
    %291 = vsyncpa [#allocation4], 1

</llo_original>
